<compile_context>
chip_gen: v5e
topology: v5e:2x2
jax: 0.10.0
libtpu: 0.0.40
codegen_flags: <defaults>
</compile_context>

<pallas_src>
import functools

import jax
import jax.numpy as jnp
from jax.experimental import pallas as pl
from jax.experimental.pallas import tpu as pltpu

H1, H2, OUT = 20, 10, 2          # true layer widths of the PyTorch module
H1P, H2P, OUTP = 24, 16, 8       # sublane-aligned (multiple-of-8) padded widths
LANE = 128                       # TPU lane width


def _round_up(n, m):
    return (n + m - 1) // m * m


def _mlp_kernel(x_ref, w1_ref, w2_ref, w3_ref, b1_ref, b2_ref, b3_ref, o_ref):
    """Fused 3-layer MLP, batch-in-lanes.

    x_ref:  [fpad, TB]   features x batch-tile (batch is lane-dense)
    w1_ref: [H1P, fpad]  w2_ref: [H2P, H1P]  w3_ref: [OUTP, H2P]  (un-transposed [out,in])
    b*_ref: [*, 1]       f32 column vectors, broadcast over lanes
    o_ref:  [OUTP, TB]   lane-dense padded output (rows >= OUT are exactly 0)

    Zero padding in weights/biases keeps padded rows exactly 0 through bias-add,
    ReLU and the next matmul, so the math matches the unpadded MLP.
    """
    xt = x_ref[...]
    w2 = w2_ref[...]
    w3 = w3_ref[...]

    h1 = jnp.dot(w1_ref[...], xt, preferred_element_type=jnp.float32) + b1_ref[...]
    h1 = jnp.maximum(h1, 0.0).astype(w2.dtype)                      # [H1P, TB]
    h2 = jnp.dot(w2, h1, preferred_element_type=jnp.float32) + b2_ref[...]
    h2 = jnp.maximum(h2, 0.0).astype(w3.dtype)                      # [H2P, TB]
    y = jnp.dot(w3, h2, preferred_element_type=jnp.float32) + b3_ref[...]
    o_ref[...] = y.astype(o_ref.dtype)                              # lane-dense store


def pack_params(params, dtype=jnp.float32):
    """One-time packing: keep [out,in] orientation, zero-pad out dims to 24/16/8
    sublanes and in dims to multiples of 8.  `dtype=jnp.bfloat16` enables the fast
    path (f32 accumulation is preserved in-kernel); biases always stay f32."""
    (w1, b1), (w2, b2), (w3, b3) = params["l1"], params["l2"], params["l3"]
    input_size = w1.shape[1]
    fpad = _round_up(input_size, 8)

    def pad2(a, rows, cols, dt):
        out = jnp.zeros((rows, cols), dt)
        return out.at[: a.shape[0], : a.shape[1]].set(a.astype(dt))

    packed = {
        "w1": pad2(w1, H1P, fpad, dtype),          # [24, fpad]
        "w2": pad2(w2, H2P, H1P, dtype),           # [16, 24]
        "w3": pad2(w3, OUTP, H2P, dtype),          # [8, 16]
        "b1": pad2(b1[:, None], H1P, 1, jnp.float32),
        "b2": pad2(b2[:, None], H2P, 1, jnp.float32),
        "b3": pad2(b3[:, None], OUTP, 1, jnp.float32),
    }
    return packed, fpad


@functools.partial(jax.jit, static_argnames=("fpad", "tm"))
def mlp_forward(x, packed, *, fpad, tm=2048):
    """x: [B, input_size] float32.  packed/fpad from pack_params.  Returns [B, 2] f32."""
    B, input_size = x.shape
    xdtype = packed["w1"].dtype
    itemsize = jnp.dtype(xdtype).itemsize

    # ---- batch-lane tile selection (static Python ints) ----
    bp_min = _round_up(B, LANE)
    tm_eff = min(tm, bp_min)
    if bp_min > LANE:                       # >= 2 grid steps -> both v7x TCs engage
        tm_eff = min(tm_eff, max(LANE, _round_up((bp_min + 1) // 2, LANE)))
    # VMEM guardrail: double-buffered x tile <= ~8 MiB (safe vs v7x 32 MiB scoped default)
    max_tm_vmem = max(LANE, (8 * 1024 * 1024 // (2 * fpad * itemsize)) // LANE * LANE)
    tm_eff = max(LANE, min(tm_eff, max_tm_vmem))
    bp = _round_up(B, tm_eff)

    # Feature-major, zero-padded x (pad + transpose fuse into one XLA op inside this jit).
    xt = jnp.zeros((fpad, bp), xdtype).at[:input_size, :B].set(x.astype(xdtype).T)

    flops = 2 * bp * (fpad * H1P + H1P * H2P + H2P * OUTP)
    bytes_accessed = (
        fpad * bp * itemsize                                   # x
        + OUTP * bp * 4                                        # y
        + (H1P * fpad + H2P * H1P + OUTP * H2P) * itemsize     # weights
        + (H1P + H2P + OUTP) * 4                               # biases
    )

    out_t = pl.pallas_call(
        _mlp_kernel,
        out_shape=jax.ShapeDtypeStruct((OUTP, bp), jnp.float32),
        grid=(bp // tm_eff,),
        in_specs=[
            pl.BlockSpec((fpad, tm_eff), lambda i: (0, i)),    # x: tiled over batch lanes
            pl.BlockSpec((H1P, fpad), lambda i: (0, 0)),       # weights/biases: VMEM resident
            pl.BlockSpec((H2P, H1P), lambda i: (0, 0)),
            pl.BlockSpec((OUTP, H2P), lambda i: (0, 0)),
            pl.BlockSpec((H1P, 1), lambda i: (0, 0)),
            pl.BlockSpec((H2P, 1), lambda i: (0, 0)),
            pl.BlockSpec((OUTP, 1), lambda i: (0, 0)),
        ],
        out_specs=pl.BlockSpec((OUTP, tm_eff), lambda i: (0, i)),
        compiler_params=pltpu.CompilerParams(
            dimension_semantics=("parallel",),                 # 2 TCs on v7x
        ),
        cost_estimate=pl.CostEstimate(
            flops=flops, transcendentals=0, bytes_accessed=bytes_accessed
        ),
    )(xt, packed["w1"], packed["w2"], packed["w3"],
      packed["b1"], packed["b2"], packed["b3"])

    # Keep only the real 2 output rows / B batch lanes, back to [B, 2].
    return out_t[:OUT, :B].T


def init_params(key, input_size):
    """Deterministic init mimicking PyTorch nn.Linear default (uniform +/- 1/sqrt(fan_in))."""
    def linear_init(k, fan_in, fan_out):
        kw, kb = jax.random.split(k)
        bound = 1.0 / jnp.sqrt(fan_in)
        w = jax.random.uniform(kw, (fan_out, fan_in), jnp.float32, -bound, bound)
        b = jax.random.uniform(kb, (fan_out,), jnp.float32, -bound, bound)
        return w, b

    k1, k2, k3 = jax.random.split(key, 3)
    return {
        "l1": linear_init(k1, input_size, H1),
        "l2": linear_init(k2, H1, H2),
        "l3": linear_init(k3, H2, OUT),
    }


if __name__ == "__main__":
    key = jax.random.PRNGKey(0)
    kx, kp = jax.random.split(key)

    batch, input_size = 8, 32
    x = jax.random.normal(kx, (batch, input_size), jnp.float32)
    params = init_params(kp, input_size)

    # Pure-JAX reference (same math as the PyTorch forward).
    (w1, b1), (w2, b2), (w3, b3) = params["l1"], params["l2"], params["l3"]
    h = jnp.maximum(x @ w1.T + b1, 0.0)
    h = jnp.maximum(h @ w2.T + b2, 0.0)
    ref = h @ w3.T + b3

    # f32 path: matches the PyTorch reference to tight tolerance.
    packed_f32, fpad = pack_params(params, dtype=jnp.float32)
    out = mlp_forward(x, packed_f32, fpad=fpad)
    jax.block_until_ready(out)
    assert out.shape == (batch, OUT)
    assert jnp.allclose(out, ref, atol=1e-5, rtol=1e-5)

    # Optional bf16 fast path (f32 accumulation; looser numerics by design).
    packed_bf16, fpad = pack_params(params, dtype=jnp.bfloat16)
    out_bf16 = mlp_forward(x, packed_bf16, fpad=fpad)
    jax.block_until_ready(out_bf16)
    assert out_bf16.shape == (batch, OUT)
    assert jnp.allclose(out_bf16, ref, atol=5e-2, rtol=5e-2)

    print("KERNEL_OK")
</pallas_src>

<mosaic_0001>
module attributes {stable_mosaic.version = 11 : i64} {
  func.func @_mlp_kernel(%arg0: i32, %arg1: memref<32x128xf32, #tpu.memory_space<vmem>>, %arg2: memref<24x32xf32, #tpu.memory_space<vmem>>, %arg3: memref<16x24xf32, #tpu.memory_space<vmem>>, %arg4: memref<8x16xf32, #tpu.memory_space<vmem>>, %arg5: memref<24x1xf32, #tpu.memory_space<vmem>>, %arg6: memref<16x1xf32, #tpu.memory_space<vmem>>, %arg7: memref<8x1xf32, #tpu.memory_space<vmem>>, %arg8: memref<8x128xf32, #tpu.memory_space<vmem>>) attributes {dimension_semantics = [#tpu.dimension_semantics<parallel>], iteration_bounds = array<i64: 1>, scalar_prefetch = 0 : i64, scratch_operands = 0 : i64, tpu.core_type = #tpu.core_type<tc>, window_params = [{transform_indices = @transform_0, window_bounds = array<i64: 32, 128>}, {pipeline_mode = #tpu.pipeline_mode<synchronous>, transform_indices = @transform_1, window_bounds = array<i64: 24, 32>}, {pipeline_mode = #tpu.pipeline_mode<synchronous>, transform_indices = @transform_2, window_bounds = array<i64: 16, 24>}, {pipeline_mode = #tpu.pipeline_mode<synchronous>, transform_indices = @transform_3, window_bounds = array<i64: 8, 16>}, {pipeline_mode = #tpu.pipeline_mode<synchronous>, transform_indices = @transform_4, window_bounds = array<i64: 24, 1>}, {pipeline_mode = #tpu.pipeline_mode<synchronous>, transform_indices = @transform_5, window_bounds = array<i64: 16, 1>}, {pipeline_mode = #tpu.pipeline_mode<synchronous>, transform_indices = @transform_6, window_bounds = array<i64: 8, 1>}, {transform_indices = @transform_7, window_bounds = array<i64: 8, 128>}]} {
    %c0 = arith.constant 0 : index
    %c0_0 = arith.constant 0 : index
    %0 = vector.load %arg1[%c0, %c0_0] : memref<32x128xf32, #tpu.memory_space<vmem>>, vector<32x128xf32>
    %c0_1 = arith.constant 0 : index
    %c0_2 = arith.constant 0 : index
    %1 = vector.load %arg3[%c0_1, %c0_2] : memref<16x24xf32, #tpu.memory_space<vmem>>, vector<16x24xf32>
    %c0_3 = arith.constant 0 : index
    %c0_4 = arith.constant 0 : index
    %2 = vector.load %arg4[%c0_3, %c0_4] : memref<8x16xf32, #tpu.memory_space<vmem>>, vector<8x16xf32>
    %c0_5 = arith.constant 0 : index
    %c0_6 = arith.constant 0 : index
    %3 = vector.load %arg2[%c0_5, %c0_6] : memref<24x32xf32, #tpu.memory_space<vmem>>, vector<24x32xf32>
    %cst = arith.constant dense<0.000000e+00> : vector<24x128xf32>
    %4 = tpu.matmul %3, %0, %cst {dimension_numbers = #tpu.dot_dimension_numbers<[1], [0], [0], [1], [0, 0, 1, 1], [], []>} : vector<24x32xf32>, vector<32x128xf32>, vector<24x128xf32> -> vector<24x128xf32>
    %c0_7 = arith.constant 0 : index
    %c0_8 = arith.constant 0 : index
    %5 = vector.load %arg5[%c0_7, %c0_8] : memref<24x1xf32, #tpu.memory_space<vmem>>, vector<24x1xf32>
    %6 = vector.broadcast %5 : vector<24x1xf32> to vector<24x128xf32>
    %7 = arith.addf %4, %6 : vector<24x128xf32>
    %cst_9 = arith.constant 0.000000e+00 : f32
    %8 = vector.broadcast %cst_9 : f32 to vector<24x128xf32>
    %9 = arith.maximumf %7, %8 : vector<24x128xf32>
    %cst_10 = arith.constant dense<0.000000e+00> : vector<16x128xf32>
    %10 = tpu.matmul %1, %9, %cst_10 {dimension_numbers = #tpu.dot_dimension_numbers<[1], [0], [0], [1], [0, 0, 1, 1], [], []>} : vector<16x24xf32>, vector<24x128xf32>, vector<16x128xf32> -> vector<16x128xf32>
    %c0_11 = arith.constant 0 : index
    %c0_12 = arith.constant 0 : index
    %11 = vector.load %arg6[%c0_11, %c0_12] : memref<16x1xf32, #tpu.memory_space<vmem>>, vector<16x1xf32>
    %12 = vector.broadcast %11 : vector<16x1xf32> to vector<16x128xf32>
    %13 = arith.addf %10, %12 : vector<16x128xf32>
    %cst_13 = arith.constant 0.000000e+00 : f32
    %14 = vector.broadcast %cst_13 : f32 to vector<16x128xf32>
    %15 = arith.maximumf %13, %14 : vector<16x128xf32>
    %cst_14 = arith.constant dense<0.000000e+00> : vector<8x128xf32>
    %16 = tpu.matmul %2, %15, %cst_14 {dimension_numbers = #tpu.dot_dimension_numbers<[1], [0], [0], [1], [0, 0, 1, 1], [], []>} : vector<8x16xf32>, vector<16x128xf32>, vector<8x128xf32> -> vector<8x128xf32>
    %c0_15 = arith.constant 0 : index
    %c0_16 = arith.constant 0 : index
    %17 = vector.load %arg7[%c0_15, %c0_16] : memref<8x1xf32, #tpu.memory_space<vmem>>, vector<8x1xf32>
    %18 = vector.broadcast %17 : vector<8x1xf32> to vector<8x128xf32>
    %19 = arith.addf %16, %18 : vector<8x128xf32>
    %c0_17 = arith.constant 0 : index
    %c0_18 = arith.constant 0 : index
    %20 = vector.load %arg8[%c0_17, %c0_18] : memref<8x128xf32, #tpu.memory_space<vmem>>, vector<8x128xf32>
    tpu.vector_store %arg8[%c0_17, %c0_18], %19 {strides = array<i32>} : memref<8x128xf32, #tpu.memory_space<vmem>>, vector<8x128xf32>,
    return
  }
  func.func @transform_0(%arg0: i32) -> (i32, i32) {
    %c0_i32 = arith.constant 0 : i32
    %c0_i32_0 = arith.constant 0 : i32
    return %c0_i32, %arg0 : i32, i32
  }
  func.func @transform_1(%arg0: i32) -> (i32, i32) {
    %c0_i32 = arith.constant 0 : i32
    %c0_i32_0 = arith.constant 0 : i32
    %c0_i32_1 = arith.constant 0 : i32
    return %c0_i32, %c0_i32_0 : i32, i32
  }
  func.func @transform_2(%arg0: i32) -> (i32, i32) {
    %c0_i32 = arith.constant 0 : i32
    %c0_i32_0 = arith.constant 0 : i32
    %c0_i32_1 = arith.constant 0 : i32
    return %c0_i32, %c0_i32_0 : i32, i32
  }
  func.func @transform_3(%arg0: i32) -> (i32, i32) {
    %c0_i32 = arith.constant 0 : i32
    %c0_i32_0 = arith.constant 0 : i32
    %c0_i32_1 = arith.constant 0 : i32
    return %c0_i32, %c0_i32_0 : i32, i32
  }
  func.func @transform_4(%arg0: i32) -> (i32, i32) {
    %c0_i32 = arith.constant 0 : i32
    %c0_i32_0 = arith.constant 0 : i32
    %c0_i32_1 = arith.constant 0 : i32
    return %c0_i32, %c0_i32_0 : i32, i32
  }
  func.func @transform_5(%arg0: i32) -> (i32, i32) {
    %c0_i32 = arith.constant 0 : i32
    %c0_i32_0 = arith.constant 0 : i32
    %c0_i32_1 = arith.constant 0 : i32
    return %c0_i32, %c0_i32_0 : i32, i32
  }
  func.func @transform_6(%arg0: i32) -> (i32, i32) {
    %c0_i32 = arith.constant 0 : i32
    %c0_i32_0 = arith.constant 0 : i32
    %c0_i32_1 = arith.constant 0 : i32
    return %c0_i32, %c0_i32_0 : i32, i32
  }
  func.func @transform_7(%arg0: i32) -> (i32, i32) {
    %c0_i32 = arith.constant 0 : i32
    %c0_i32_0 = arith.constant 0 : i32
    return %c0_i32, %arg0 : i32, i32
  }
}

</mosaic_0001>

<llo_original>
// kernel: mlp_forward.1
$region0: #{mlp_forward.1}
  #allocation0 [shape = 'u32[]', space=smem, size = 0x4, offset = 0x4, fixed_abs, tag = 'smem constant byte address 0x4 - core index']
  #allocation1 [shape = 'u32[72,128]{1,0:T(1,128)}', space=vmem, size = 0x9000, scoped, tag = 'internal scratch']
  %s0 = inlined_call_operand.vmem [shape: f32[32,128], index: 0, kind: input, shape index: {}]
  %s1 = inlined_call_operand.vmem [shape: f32[24,32], index: 1, kind: input, shape index: {}]
  %s2 = inlined_call_operand.vmem [shape: f32[16,24], index: 2, kind: input, shape index: {}]
  %s3 = inlined_call_operand.vmem [shape: f32[8,16], index: 3, kind: input, shape index: {}]
  %s4 = inlined_call_operand.vmem [shape: f32[24,1], index: 4, kind: input, shape index: {}]
  %s5 = inlined_call_operand.vmem [shape: f32[16,1], index: 5, kind: input, shape index: {}]
  %s6 = inlined_call_operand.vmem [shape: f32[8,1], index: 6, kind: input, shape index: {}]
  %s7 = inlined_call_operand.vmem [shape: f32[8,128], index: 7, kind: output, shape index: {}]
  %s8 = sld [smem:[#allocation0]]
  $region38: #{mlp_forward.1} parent=0
    _
  %s10 = ssub.s32 1, %s8
  %s11 = scalar_select 0, %s10, %s8
  // Predicated region
  $region2: #{mlp_forward.1} parent=0 // pred_check
    _
  $region3: #{mlp_forward.1} parent=0 // pred_check_branch
    %13 = sbr.rel (0) target = $region5
  $region4: #{mlp_forward.1} parent=0 // pred_region
    _
  $region5: #{mlp_forward.1} parent=0 // pred_fallthru
    _
  // Predicated region
  $region6: #{mlp_forward.1} parent=0 // pred_check
    _
  $region7: #{mlp_forward.1} parent=0 // pred_check_branch
    %15 = sbr.rel (0) target = $region9
  $region8: #{mlp_forward.1} parent=0 // pred_region
    _
  $region9: #{mlp_forward.1} parent=0 // pred_fallthru
    _
  // Predicated region
  $region10: #{mlp_forward.1} parent=0 // pred_check
    _
  $region11: #{mlp_forward.1} parent=0 // pred_check_branch
    %17 = sbr.rel (0) target = $region13
  $region12: #{mlp_forward.1} parent=0 // pred_region
    _
  $region13: #{mlp_forward.1} parent=0 // pred_fallthru
    _
  // Predicated region
  $region14: #{mlp_forward.1} parent=0 // pred_check
    _
  $region15: #{mlp_forward.1} parent=0 // pred_check_branch
    %19 = sbr.rel (0) target = $region17
  $region16: #{mlp_forward.1} parent=0 // pred_region
    _
  $region17: #{mlp_forward.1} parent=0 // pred_fallthru
    _
  // Predicated region
  $region18: #{mlp_forward.1} parent=0 // pred_check
    _
  $region19: #{mlp_forward.1} parent=0 // pred_check_branch
    %21 = sbr.rel (0) target = $region21
  $region20: #{mlp_forward.1} parent=0 // pred_region
    _
  $region21: #{mlp_forward.1} parent=0 // pred_fallthru
    _
  // Predicated region
  $region22: #{mlp_forward.1} parent=0 // pred_check
    _
  $region23: #{mlp_forward.1} parent=0 // pred_check_branch
    %23 = sbr.rel (0) target = $region25
  $region24: #{mlp_forward.1} parent=0 // pred_region
    _
  $region25: #{mlp_forward.1} parent=0 // pred_fallthru
    _
  // Predicated region
  $region26: #{mlp_forward.1} parent=0 // pred_check
    _
  $region27: #{mlp_forward.1} parent=0 // pred_check_branch
    %25 = sbr.rel (0) target = $region29
  $region28: #{mlp_forward.1} parent=0 // pred_region
    _
  $region29: #{mlp_forward.1} parent=0 // pred_fallthru
    _
  %v26 = vld [vmem:[%s0] sm:$0xff]
  %v27 = vld [vmem:[%s0 + $0x8] sm:$0xff]
  %v28 = vld [vmem:[%s0 + $0x10] sm:$0xff]
  %v29 = vld [vmem:[%s0 + $0x18] sm:$0xff]
  %v30 = vld [vmem:[%s2] sm:$0xff]
  %v31 = vld [vmem:[%s2 + $0x8] sm:$0xff]
  %v32 = vld [vmem:[%s3] sm:$0xff]
  %v33 = vld [vmem:[%s1] sm:$0xff]
  %v34 = vld [vmem:[%s1 + $0x8] sm:$0xff]
  %v35 = vld [vmem:[%s1 + $0x10] sm:$0xff]
  %v36 = vld [vmem:[%s4] sm:$0xff]
  %v37 = vld [vmem:[%s4 + $0x8] sm:$0xff]
  %v38 = vld [vmem:[%s4 + $0x10] sm:$0xff]
  %40 = vset.pattern.permute.xlu0 0
  %41 = vperm.xlu0 %40, %v36
  %v42 = vpop.permute.xlu0 %41
  %45 = vset.pattern.permute.xlu0 0
  %46 = vperm.xlu0 %45, %v37
  %v47 = vpop.permute.xlu0 %46
  %50 = vset.pattern.permute.xlu0 0
  %51 = vperm.xlu0 %50, %v38
  %v52 = vpop.permute.xlu0 %51
  %vm54 = vcmask 261120
  %v56 = vsel %vm54, %v33, 0
  %v59 = vsel %vm54, %v34, 0
  %v62 = vsel %vm54, %v35, 0
  %64 = vmatpush.msra.mxu0 0.0
  %65 = vmatpush.msra.mxu0 0.0
  %66 = vmatpush.msra.mxu0 0.0
  %67 = vmatpush.msra.mxu0 0.0
  %68 = vmatpush.msra.mxu0 0.0
  %69 = vmatpush.msra.mxu0 0.0
  %70 = vmatpush.msra.mxu0 0.0
  %71 = vmatpush.msra.mxu0 0.0
  %72 = vmatpush.msra.mxu0 0.0
  %73 = vmatpush.msra.mxu0 0.0
  %74 = vmatpush.msra.mxu0 0.0
  %75 = vmatpush.msra.mxu0 0.0
  %76 = vmatpush.msra.mxu0 %v29
  %77 = vmatpush.msra.mxu0 %v28
  %78 = vmatpush.msra.mxu0 %v27
  %79 = vmatpush.msra.mxu0 %v26
  %80 = vmatmul.f32.gmra.mxu0 %v56
  %v81 = vpop.f32.mrf.mxu0
  %v82 = vadd.f32 %v42, %v81
  %83 = vmatmul.f32.gmra.mxu0 %v59
  %v84 = vpop.f32.mrf.mxu0
  %v85 = vadd.f32 %v47, %v84
  %86 = vmatmul.f32.gmra.mxu0 %v62
  %v87 = vpop.f32.mrf.mxu0
  %v88 = vadd.f32 %v52, %v87
  %89 = vdwg.mxu0
  %v90 = vmax.f32 %v82, 0.0
  %v91 = vmax.f32 %v85, 0.0
  %v92 = vmax.f32 %v88, 0.0
  %v93 = vld [vmem:[%s5] sm:$0xff]
  %v94 = vld [vmem:[%s5 + $0x8] sm:$0xff]
  %96 = vset.pattern.permute.xlu0 0
  %97 = vperm.xlu0 %96, %v93
  %v98 = vpop.permute.xlu0 %97
  %101 = vset.pattern.permute.xlu0 0
  %102 = vperm.xlu0 %101, %v94
  %v103 = vpop.permute.xlu0 %102
  %vm105 = vcmask 195584
  %v107 = vsel %vm105, %v30, 0
  %v110 = vsel %vm105, %v31, 0
  %112 = vmatpush.msra.mxu0 0.0
  %113 = vmatpush.msra.mxu0 0.0
  %114 = vmatpush.msra.mxu0 0.0
  %115 = vmatpush.msra.mxu0 0.0
  %116 = vmatpush.msra.mxu0 0.0
  %117 = vmatpush.msra.mxu0 0.0
  %118 = vmatpush.msra.mxu0 0.0
  %119 = vmatpush.msra.mxu0 0.0
  %120 = vmatpush.msra.mxu0 0.0
  %121 = vmatpush.msra.mxu0 0.0
  %122 = vmatpush.msra.mxu0 0.0
  %123 = vmatpush.msra.mxu0 0.0
  %124 = vmatpush.msra.mxu0 0.0
  %125 = vmatpush.msra.mxu0 %v92
  %126 = vmatpush.msra.mxu0 %v91
  %127 = vmatpush.msra.mxu0 %v90
  %128 = vmatmul.f32.gmra.mxu0 %v107
  %v129 = vpop.f32.mrf.mxu0
  %v130 = vadd.f32 %v98, %v129
  %131 = vmatmul.f32.gmra.mxu0 %v110
  %v132 = vpop.f32.mrf.mxu0
  %v133 = vadd.f32 %v103, %v132
  %134 = vdwg.mxu0
  %v135 = vmax.f32 %v130, 0.0
  %v136 = vmax.f32 %v133, 0.0
  %v137 = vld [vmem:[%s6] sm:$0xff]
  %139 = vset.pattern.permute.xlu0 0
  %140 = vperm.xlu0 %139, %v137
  %v141 = vpop.permute.xlu0 %140
  %vm143 = vcmask 130048
  %v145 = vsel %vm143, %v32, 0
  %147 = vmatpush.msra.mxu0 0.0
  %148 = vmatpush.msra.mxu0 0.0
  %149 = vmatpush.msra.mxu0 0.0
  %150 = vmatpush.msra.mxu0 0.0
  %151 = vmatpush.msra.mxu0 0.0
  %152 = vmatpush.msra.mxu0 0.0
  %153 = vmatpush.msra.mxu0 0.0
  %154 = vmatpush.msra.mxu0 0.0
  %155 = vmatpush.msra.mxu0 0.0
  %156 = vmatpush.msra.mxu0 0.0
  %157 = vmatpush.msra.mxu0 0.0
  %158 = vmatpush.msra.mxu0 0.0
  %159 = vmatpush.msra.mxu0 0.0
  %160 = vmatpush.msra.mxu0 0.0
  %161 = vmatpush.msra.mxu0 %v136
  %162 = vmatpush.msra.mxu0 %v135
  %163 = vmatmul.f32.gmra.mxu0 %v145
  %v164 = vpop.f32.mrf.mxu0
  %v165 = vadd.f32 %v141, %v164
  %166 = vdwg.mxu0
  %167 = vst [vmem:[%s7] sm:$0xff] %v165
  // Predicated region
  $region30: #{mlp_forward.1} parent=0 // pred_check
    _
  $region31: #{mlp_forward.1} parent=0 // pred_check_branch
    %169 = sbr.rel (0) target = $region33
  $region32: #{mlp_forward.1} parent=0 // pred_region
    _
  $region33: #{mlp_forward.1} parent=0 // pred_fallthru
    _
  // Predicated region
  $region34: #{mlp_forward.1} parent=0 // pred_check
    _
  $region35: #{mlp_forward.1} parent=0 // pred_check_branch
    %171 = sbr.rel (0) target = $region37
  $region36: #{mlp_forward.1} parent=0 // pred_region
    _
  $region37: #{mlp_forward.1} parent=0 // pred_fallthru
    _

</llo_original>
